<compile_context>
chip_gen: v7x
topology: tpu7x:2x2x1
jax: 0.10.0
libtpu: 0.0.40
codegen_flags: <defaults>
</compile_context>

<pallas_src>
import jax
import jax.numpy as jnp
from jax.experimental import pallas as pl
from jax.experimental.pallas import tpu as pltpu

INPUT_SIZE = 512
HIDDEN1 = 128
HIDDEN2 = 64
H2_PAD = 128           # lane-dense padded hidden2 width
OUTPUT_SIZE = 6
OUT_W = 8              # narrow f32 output width written back to HBM
W3_PAD = 128           # fc3 matmul done lane-dense, then sliced to OUT_W
DROPOUT_RATIO = 0.4    # unused in eval-mode forward


def _cdiv(a, b):
    return (a + b - 1) // b


def _round_up(n, m):
    return _cdiv(n, m) * m


def _choose_tile(B, tb):
    """Pick a batch tile TB (multiple of 8, TB <= B) and grid size."""
    n = _cdiv(B, tb)
    if B >= 16:
        n = max(n, 2)          # >=2 grid steps so v7x megacore can shard the batch
    TB = _round_up(_cdiv(B, n), 8)
    if TB > B:                 # only possible for small B; keep block <= array dim
        TB = max(8, (B // 8) * 8)
    return TB, _cdiv(B, TB)


def _mlp_kernel(x_ref, w1_ref, b1_ref, w2_ref, b2_ref, w3_ref, b3_ref, o_ref):
    # fc + ReLU  (dropout = identity in eval mode)
    x = x_ref[...].astype(jnp.bfloat16)          # f32 read, cast on the VPU
    h1 = jnp.dot(x, w1_ref[...], preferred_element_type=jnp.float32)
    h1 = jnp.maximum(h1 + b1_ref[...], 0.0)
    # fc2 + ReLU (hidden2 lane-padded to 128; padded cols stay exactly 0)
    h2 = jnp.dot(h1.astype(jnp.bfloat16), w2_ref[...],
                 preferred_element_type=jnp.float32)
    h2 = jnp.maximum(h2 + b2_ref[...], 0.0)
    # fc3: lane-dense 128-wide matmul, narrow (OUT_W) writeback
    out = jnp.dot(h2.astype(jnp.bfloat16), w3_ref[...],
                  preferred_element_type=jnp.float32) + b3_ref[...]
    o_ref[...] = out[:, :o_ref.shape[-1]].astype(o_ref.dtype)


def simple_model(x, prep, *, tb=2048):
    """x: [B, INPUT_SIZE] float32. prep: output of prepare_params()."""
    B = x.shape[0]
    if B < 8:                                    # tiny sublane pad only for B < 8
        x = jnp.pad(x, ((0, 8 - B), (0, 0)))
    B_run = x.shape[0]
    TB, n_tiles = _choose_tile(B_run, tb)

    w1, b1 = prep["w1"], prep["b1"]              # [512,128] bf16, [1,128] f32
    w2, b2 = prep["w2"], prep["b2"]              # [128,128] bf16, [1,128] f32
    w3, b3 = prep["w3"], prep["b3"]              # [128,128] bf16, [1,128] f32

    flops = 2 * B_run * (INPUT_SIZE * HIDDEN1 + HIDDEN1 * H2_PAD + H2_PAD * W3_PAD)
    bytes_accessed = (x.size * 4
                      + (w1.size + w2.size + w3.size) * 2
                      + (b1.size + b2.size + b3.size) * 4
                      + B_run * OUT_W * 4)

    out = pl.pallas_call(
        _mlp_kernel,
        out_shape=jax.ShapeDtypeStruct((B_run, OUT_W), jnp.float32),
        grid=(n_tiles,),
        in_specs=[
            pl.BlockSpec((TB, INPUT_SIZE), lambda i: (i, 0)),        # x tile (f32)
            pl.BlockSpec((INPUT_SIZE, HIDDEN1), lambda i: (0, 0)),   # w1 (resident)
            pl.BlockSpec((1, HIDDEN1), lambda i: (0, 0)),            # b1
            pl.BlockSpec((HIDDEN1, H2_PAD), lambda i: (0, 0)),       # w2 (padded)
            pl.BlockSpec((1, H2_PAD), lambda i: (0, 0)),             # b2 (padded)
            pl.BlockSpec((H2_PAD, W3_PAD), lambda i: (0, 0)),        # w3 (padded)
            pl.BlockSpec((1, W3_PAD), lambda i: (0, 0)),             # b3 (padded)
        ],
        out_specs=pl.BlockSpec((TB, OUT_W), lambda i: (i, 0)),       # narrow output
        compiler_params=pltpu.CompilerParams(
            dimension_semantics=("parallel",)),
        cost_estimate=pl.CostEstimate(
            flops=flops, transcendentals=0, bytes_accessed=bytes_accessed),
    )(x, w1, b1, w2, b2, w3, b3)

    # Slice off the (zero) lane padding and any tiny batch padding.
    return out[:B, :OUTPUT_SIZE]


def prepare_params(params):
    """One-time (per-checkpoint) cast + pad, hoisted out of the per-call path."""
    w1 = params["w1"].astype(jnp.bfloat16)                                   # [512,128]
    w2 = jnp.pad(params["w2"], ((0, 0), (0, H2_PAD - HIDDEN2))).astype(jnp.bfloat16)
    b2 = jnp.pad(params["b2"], ((0, 0), (0, H2_PAD - HIDDEN2)))              # [1,128]
    w3 = jnp.pad(params["w3"], ((0, H2_PAD - HIDDEN2),
                                (0, W3_PAD - OUTPUT_SIZE))).astype(jnp.bfloat16)
    b3 = jnp.pad(params["b3"], ((0, 0), (0, W3_PAD - OUTPUT_SIZE)))          # [1,128]
    return {"w1": w1, "b1": params["b1"], "w2": w2, "b2": b2, "w3": w3, "b3": b3}


def init_params(key):
    """Deterministic init mimicking nn.Linear (uniform +/- 1/sqrt(fan_in)).

    PyTorch stores Linear weight as [out, in]; we store the transpose
    [in, out] so the kernel does x @ W directly.
    """
    ks = jax.random.split(key, 6)

    def linear(kw, kb, fan_in, fan_out):
        bound = 1.0 / jnp.sqrt(jnp.float32(fan_in))
        w = jax.random.uniform(kw, (fan_in, fan_out), jnp.float32, -bound, bound)
        b = jax.random.uniform(kb, (1, fan_out), jnp.float32, -bound, bound)
        return w, b

    w1, b1 = linear(ks[0], ks[1], INPUT_SIZE, HIDDEN1)
    w2, b2 = linear(ks[2], ks[3], HIDDEN1, HIDDEN2)
    w3, b3 = linear(ks[4], ks[5], HIDDEN2, OUTPUT_SIZE)
    return {"w1": w1, "b1": b1, "w2": w2, "b2": b2, "w3": w3, "b3": b3}


def _reference(x, p):
    """Pure-JAX reference mirroring the kernel's bf16-operand / f32-accum math."""
    xb = x.astype(jnp.bfloat16)
    h1 = jnp.dot(xb, p["w1"].astype(jnp.bfloat16),
                 preferred_element_type=jnp.float32)
    h1 = jnp.maximum(h1 + p["b1"], 0.0)
    h2 = jnp.dot(h1.astype(jnp.bfloat16), p["w2"].astype(jnp.bfloat16),
                 preferred_element_type=jnp.float32)
    h2 = jnp.maximum(h2 + p["b2"], 0.0)
    return jnp.dot(h2.astype(jnp.bfloat16), p["w3"].astype(jnp.bfloat16),
                   preferred_element_type=jnp.float32) + p["b3"]


if __name__ == "__main__":
    key = jax.random.PRNGKey(0)
    kx, kp = jax.random.split(key)
    params = init_params(kp)
    prep = prepare_params(params)

    # Aligned batch (splits into 2 tiles -> exercises the batch-parallel grid).
    B1 = 16
    x1 = jax.random.normal(kx, (B1, INPUT_SIZE), dtype=jnp.float32)
    out1 = jax.block_until_ready(simple_model(x1, prep))
    ref1 = _reference(x1, params)
    assert out1.shape == (B1, OUTPUT_SIZE), out1.shape
    assert jnp.allclose(out1, ref1, atol=1e-2, rtol=1e-2), "mismatch (B=16)"

    # Ragged batch (exercises the partial-last-tile boundary path).
    B2 = 10
    x2 = jax.random.normal(jax.random.PRNGKey(1), (B2, INPUT_SIZE),
                           dtype=jnp.float32)
    out2 = jax.block_until_ready(simple_model(x2, prep))
    ref2 = _reference(x2, params)
    assert out2.shape == (B2, OUTPUT_SIZE), out2.shape
    assert jnp.allclose(out2, ref2, atol=1e-2, rtol=1e-2), "mismatch (B=10)"

    print("KERNEL_OK")
</pallas_src>

<mosaic_0001>
module attributes {stable_mosaic.version = 11 : i64} {
  func.func @_mlp_kernel(%arg0: i32, %arg1: memref<8x512xf32, #tpu.memory_space<vmem>>, %arg2: memref<512x128xbf16, #tpu.memory_space<vmem>>, %arg3: memref<1x128xf32, #tpu.memory_space<vmem>>, %arg4: memref<128x128xbf16, #tpu.memory_space<vmem>>, %arg5: memref<1x128xf32, #tpu.memory_space<vmem>>, %arg6: memref<128x128xbf16, #tpu.memory_space<vmem>>, %arg7: memref<1x128xf32, #tpu.memory_space<vmem>>, %arg8: memref<8x8xf32, #tpu.memory_space<vmem>>) attributes {dimension_semantics = [#tpu.dimension_semantics<parallel>], iteration_bounds = array<i64: 2>, scalar_prefetch = 0 : i64, scratch_operands = 0 : i64, tpu.core_type = #tpu.core_type<tc>, window_params = [{transform_indices = @transform_0, window_bounds = array<i64: 8, 512>}, {pipeline_mode = #tpu.pipeline_mode<synchronous>, transform_indices = @transform_1, window_bounds = array<i64: 512, 128>}, {pipeline_mode = #tpu.pipeline_mode<synchronous>, transform_indices = @transform_2, window_bounds = array<i64: 1, 128>}, {pipeline_mode = #tpu.pipeline_mode<synchronous>, transform_indices = @transform_3, window_bounds = array<i64: 128, 128>}, {pipeline_mode = #tpu.pipeline_mode<synchronous>, transform_indices = @transform_4, window_bounds = array<i64: 1, 128>}, {pipeline_mode = #tpu.pipeline_mode<synchronous>, transform_indices = @transform_5, window_bounds = array<i64: 128, 128>}, {pipeline_mode = #tpu.pipeline_mode<synchronous>, transform_indices = @transform_6, window_bounds = array<i64: 1, 128>}, {transform_indices = @transform_7, window_bounds = array<i64: 8, 8>}]} {
    %c0 = arith.constant 0 : index
    %c0_0 = arith.constant 0 : index
    %0 = vector.load %arg1[%c0, %c0_0] : memref<8x512xf32, #tpu.memory_space<vmem>>, vector<8x512xf32>
    %1 = arith.truncf %0 : vector<8x512xf32> to vector<8x512xbf16>
    %c0_1 = arith.constant 0 : index
    %c0_2 = arith.constant 0 : index
    %2 = vector.load %arg2[%c0_1, %c0_2] : memref<512x128xbf16, #tpu.memory_space<vmem>>, vector<512x128xbf16>
    %cst = arith.constant dense<0.000000e+00> : vector<8x128xf32>
    %3 = tpu.matmul %1, %2, %cst {dimension_numbers = #tpu.dot_dimension_numbers<[1], [0], [0], [1], [0, 0, 1, 1], [], []>} : vector<8x512xbf16>, vector<512x128xbf16>, vector<8x128xf32> -> vector<8x128xf32>
    %c0_3 = arith.constant 0 : index
    %c0_4 = arith.constant 0 : index
    %4 = vector.load %arg3[%c0_3, %c0_4] : memref<1x128xf32, #tpu.memory_space<vmem>>, vector<1x128xf32>
    %5 = vector.broadcast %4 : vector<1x128xf32> to vector<8x128xf32>
    %6 = arith.addf %3, %5 : vector<8x128xf32>
    %cst_5 = arith.constant 0.000000e+00 : f32
    %7 = vector.broadcast %cst_5 : f32 to vector<8x128xf32>
    %8 = arith.maximumf %6, %7 : vector<8x128xf32>
    %9 = arith.truncf %8 : vector<8x128xf32> to vector<8x128xbf16>
    %c0_6 = arith.constant 0 : index
    %c0_7 = arith.constant 0 : index
    %10 = vector.load %arg4[%c0_6, %c0_7] : memref<128x128xbf16, #tpu.memory_space<vmem>>, vector<128x128xbf16>
    %cst_8 = arith.constant dense<0.000000e+00> : vector<8x128xf32>
    %11 = tpu.matmul %9, %10, %cst_8 {dimension_numbers = #tpu.dot_dimension_numbers<[1], [0], [0], [1], [0, 0, 1, 1], [], []>} : vector<8x128xbf16>, vector<128x128xbf16>, vector<8x128xf32> -> vector<8x128xf32>
    %c0_9 = arith.constant 0 : index
    %c0_10 = arith.constant 0 : index
    %12 = vector.load %arg5[%c0_9, %c0_10] : memref<1x128xf32, #tpu.memory_space<vmem>>, vector<1x128xf32>
    %13 = vector.broadcast %12 : vector<1x128xf32> to vector<8x128xf32>
    %14 = arith.addf %11, %13 : vector<8x128xf32>
    %cst_11 = arith.constant 0.000000e+00 : f32
    %15 = vector.broadcast %cst_11 : f32 to vector<8x128xf32>
    %16 = arith.maximumf %14, %15 : vector<8x128xf32>
    %17 = arith.truncf %16 : vector<8x128xf32> to vector<8x128xbf16>
    %c0_12 = arith.constant 0 : index
    %c0_13 = arith.constant 0 : index
    %18 = vector.load %arg6[%c0_12, %c0_13] : memref<128x128xbf16, #tpu.memory_space<vmem>>, vector<128x128xbf16>
    %cst_14 = arith.constant dense<0.000000e+00> : vector<8x128xf32>
    %19 = tpu.matmul %17, %18, %cst_14 {dimension_numbers = #tpu.dot_dimension_numbers<[1], [0], [0], [1], [0, 0, 1, 1], [], []>} : vector<8x128xbf16>, vector<128x128xbf16>, vector<8x128xf32> -> vector<8x128xf32>
    %c0_15 = arith.constant 0 : index
    %c0_16 = arith.constant 0 : index
    %20 = vector.load %arg7[%c0_15, %c0_16] : memref<1x128xf32, #tpu.memory_space<vmem>>, vector<1x128xf32>
    %21 = vector.broadcast %20 : vector<1x128xf32> to vector<8x128xf32>
    %22 = arith.addf %19, %21 : vector<8x128xf32>
    %23 = vector.extract_strided_slice %22 {offsets = [0, 0], sizes = [8, 8], strides = [1, 1]} : vector<8x128xf32> to vector<8x8xf32>
    %c0_17 = arith.constant 0 : index
    %c0_18 = arith.constant 0 : index
    %24 = vector.load %arg8[%c0_17, %c0_18] : memref<8x8xf32, #tpu.memory_space<vmem>>, vector<8x8xf32>
    tpu.vector_store %arg8[%c0_17, %c0_18], %23 {strides = array<i32>} : memref<8x8xf32, #tpu.memory_space<vmem>>, vector<8x8xf32>,
    return
  }
  func.func @transform_0(%arg0: i32) -> (i32, i32) {
    %c0_i32 = arith.constant 0 : i32
    %c0_i32_0 = arith.constant 0 : i32
    return %arg0, %c0_i32 : i32, i32
  }
  func.func @transform_1(%arg0: i32) -> (i32, i32) {
    %c0_i32 = arith.constant 0 : i32
    %c0_i32_0 = arith.constant 0 : i32
    %c0_i32_1 = arith.constant 0 : i32
    return %c0_i32, %c0_i32_0 : i32, i32
  }
  func.func @transform_2(%arg0: i32) -> (i32, i32) {
    %c0_i32 = arith.constant 0 : i32
    %c0_i32_0 = arith.constant 0 : i32
    %c0_i32_1 = arith.constant 0 : i32
    return %c0_i32, %c0_i32_0 : i32, i32
  }
  func.func @transform_3(%arg0: i32) -> (i32, i32) {
    %c0_i32 = arith.constant 0 : i32
    %c0_i32_0 = arith.constant 0 : i32
    %c0_i32_1 = arith.constant 0 : i32
    return %c0_i32, %c0_i32_0 : i32, i32
  }
  func.func @transform_4(%arg0: i32) -> (i32, i32) {
    %c0_i32 = arith.constant 0 : i32
    %c0_i32_0 = arith.constant 0 : i32
    %c0_i32_1 = arith.constant 0 : i32
    return %c0_i32, %c0_i32_0 : i32, i32
  }
  func.func @transform_5(%arg0: i32) -> (i32, i32) {
    %c0_i32 = arith.constant 0 : i32
    %c0_i32_0 = arith.constant 0 : i32
    %c0_i32_1 = arith.constant 0 : i32
    return %c0_i32, %c0_i32_0 : i32, i32
  }
  func.func @transform_6(%arg0: i32) -> (i32, i32) {
    %c0_i32 = arith.constant 0 : i32
    %c0_i32_0 = arith.constant 0 : i32
    %c0_i32_1 = arith.constant 0 : i32
    return %c0_i32, %c0_i32_0 : i32, i32
  }
  func.func @transform_7(%arg0: i32) -> (i32, i32) {
    %c0_i32 = arith.constant 0 : i32
    %c0_i32_0 = arith.constant 0 : i32
    return %arg0, %c0_i32 : i32, i32
  }
}

</mosaic_0001>

<llo_original>
// kernel: tpu_custom_call.1
$region0: #{tpu_custom_call.1}
  #allocation0 [shape = 'u32[]', space=smem, size = 0x4, offset = 0x4, fixed_abs, tag = 'smem constant byte address 0x4 - core index']
  #allocation1 [shape = 'u32[144,128]{1,0:T(1,128)}', space=vmem, size = 0x12000, scoped, tag = 'internal scratch']
  %s0 = inlined_call_operand.hbm [shape: f32[16,512], index: 0, kind: input, shape index: {}]
  %s1 = inlined_call_operand.hbm [shape: bf16[512,128], index: 1, kind: input, shape index: {}]
  %s2 = inlined_call_operand.vmem [shape: f32[1,128], index: 2, kind: input, shape index: {}]
  %s3 = inlined_call_operand.hbm [shape: bf16[128,128], index: 3, kind: input, shape index: {}]
  %s4 = inlined_call_operand.vmem [shape: f32[1,128], index: 4, kind: input, shape index: {}]
  %s5 = inlined_call_operand.hbm [shape: bf16[128,128], index: 5, kind: input, shape index: {}]
  %s6 = inlined_call_operand.vmem [shape: f32[1,128], index: 6, kind: input, shape index: {}]
  %s7 = inlined_call_operand.vmem [shape: f32[16,8], index: 7, kind: output, shape index: {}]
  %s8 = sld [smem:[#allocation0]]
  $region77: #{tpu_custom_call.1} parent=0
    _
  %s10 = ssub.s32 1, %s8
  %s11 = scalar_select 0, %s10, %s8
  $region1: #{tpu_custom_call.1} parent=0
    #allocation2 [shape = 'u8[32768]{0}', space=vmem, size = 0x8000, scoped, tag = 'input window, operand 0']
    #allocation3 [shape = 's32[2]{0}', space=sflag, size = 0x8, scoped, tag = 'scoped memory for tpu_custom_call.1']
    #allocation4 [shape = 'u8[131072]{0}', space=vmem, size = 0x20000, scoped, tag = 'input window, operand 1, single buffered']
    #allocation5 [shape = 's32[1]{0}', space=sflag, size = 0x4, scoped, tag = 'scoped memory for tpu_custom_call.1']
    #allocation6 [shape = 'u8[32768]{0}', space=vmem, size = 0x8000, scoped, tag = 'input window, operand 3, single buffered']
    #allocation7 [shape = 'u8[32768]{0}', space=vmem, size = 0x8000, scoped, tag = 'input window, operand 5, single buffered']
    #allocation8 [shape = 's32[1]{0}', space=sflag, size = 0x4, scoped, tag = 'scoped memory for tpu_custom_call.1']
    %12 = vsyncpa [#allocation3], 0
    %s13 = scalar_lea.sflag [#allocation3], 1
    %14 = vsyncpa %s13, 0
    %15 = vsyncpa [#allocation5], 0
    %16 = vsyncpa [#allocation8], 0
    loop: start=0, step=1, limit=4
    $region2: #{tpu_custom_call.1} parent=1 // loop_pre_header
      _
    $region3: #{tpu_custom_call.1} parent=1 // loop_header
      %s18 = sphi 0, %s22
      %p19 = scmp.ge.s32.totalorder %s18, 4
      %s28 = sphi 0, %s30
      %s31 = sphi 0, %s28
      %s32 = sphi 0, %s31
      %s48 = sphi 0, %s32
      %s52 = sphi 0, %s52
      %s54 = sphi 0, %s52
      %s55 = sphi 0, %s54
      %s69 = sphi 0, %s55
      %s73 = sphi 0, %s73
      %s75 = sphi 0, %s73
      %s76 = sphi 0, %s75
      %s90 = sphi 0, %s76
      %s94 = sphi 0, %s94
      %s96 = sphi 0, %s94
      %s97 = sphi 0, %s96
      %s111 = sphi 0, %s97
      %s115 = sphi 0, %s115
      %s117 = sphi 0, %s115
      %s118 = sphi 0, %s117
      %s132 = sphi 0, %s118
      %s136 = sphi 0, %s136
      %s138 = sphi 0, %s136
      %s139 = sphi 0, %s138
      %s153 = sphi 0, %s139
      %s157 = sphi 0, %s157
      %s159 = sphi 0, %s157
      %s160 = sphi 0, %s159
      %s174 = sphi 0, %s160
      %s180 = sphi 0, %s182
      %s183 = sphi 0, %s180
      %s184 = sphi 0, %s183
      %s200 = sphi 0, %s184
    $region4: #{tpu_custom_call.1} parent=1 // loop_header_branch
      %21 = sbr.rel (%p19) target = $region8
    $region5: #{tpu_custom_call.1} parent=1 // loop_body
      %s23 = ssub.s32 %s18, 1
      %s24 = ssub.s32 %s18, 2
      %s25 = sadd.s32 %s18, 1
      %s26 = ssub.s32 %s18, %s25
      %p27 = scmp.eq.s32.totalorder %s26, 0
      %s29 = sadd.s32 %s28, 1
      %s30 = scalar_select %p27, %s28, %s29
      %p33 = pneg %p27
      %p34 = scmp.eq.s32.totalorder %s18, 1
      %p35 = por %p33, %p34
      %p36 = scmp.ne.s32.totalorder %s28, %s31
      %p37 = scmp.eq.s32.totalorder %s18, 0
      %p38 = por %p36, %p37
      %p39 = scmp.ne.s32.totalorder %s28, %s31
      %p40 = scmp.eq.s32.totalorder %s23, 1
      %p41 = por %p39, %p40
      %p42 = scmp.ne.s32.totalorder %s31, %s32
      %p43 = scmp.eq.s32.totalorder %s23, 0
      %p44 = por %p42, %p43
      %p45 = scmp.ne.s32.totalorder %s31, %s32
      %p46 = scmp.eq.s32.totalorder %s24, 1
      %p47 = por %p45, %p46
      %p49 = scmp.ne.s32.totalorder %s32, %s48
      %p50 = scmp.eq.s32.totalorder %s24, 0
      %p51 = por %p49, %p50
      %s53 = sadd.s32 %s52, 1
      %p56 = scmp.eq.s32.totalorder %s18, 1
      %p57 = scmp.ne.s32.totalorder %s52, %s54
      %p58 = scmp.eq.s32.totalorder %s18, 0
      %p59 = por %p57, %p58
      %p60 = scmp.ne.s32.totalorder %s52, %s54
      %p61 = scmp.eq.s32.totalorder %s23, 1
      %p62 = por %p60, %p61
      %p63 = scmp.ne.s32.totalorder %s54, %s55
      %p64 = scmp.eq.s32.totalorder %s23, 0
      %p65 = por %p63, %p64
      %p66 = scmp.ne.s32.totalorder %s54, %s55
      %p67 = scmp.eq.s32.totalorder %s24, 1
      %p68 = por %p66, %p67
      %p70 = scmp.ne.s32.totalorder %s55, %s69
      %p71 = scmp.eq.s32.totalorder %s24, 0
      %p72 = por %p70, %p71
      %s74 = sadd.s32 %s73, 1
      %p77 = scmp.eq.s32.totalorder %s18, 1
      %p78 = scmp.ne.s32.totalorder %s73, %s75
      %p79 = scmp.eq.s32.totalorder %s18, 0
      %p80 = por %p78, %p79
      %p81 = scmp.ne.s32.totalorder %s73, %s75
      %p82 = scmp.eq.s32.totalorder %s23, 1
      %p83 = por %p81, %p82
      %p84 = scmp.ne.s32.totalorder %s75, %s76
      %p85 = scmp.eq.s32.totalorder %s23, 0
      %p86 = por %p84, %p85
      %p87 = scmp.ne.s32.totalorder %s75, %s76
      %p88 = scmp.eq.s32.totalorder %s24, 1
      %p89 = por %p87, %p88
      %p91 = scmp.ne.s32.totalorder %s76, %s90
      %p92 = scmp.eq.s32.totalorder %s24, 0
      %p93 = por %p91, %p92
      %s95 = sadd.s32 %s94, 1
      %p98 = scmp.eq.s32.totalorder %s18, 1
      %p99 = scmp.ne.s32.totalorder %s94, %s96
      %p100 = scmp.eq.s32.totalorder %s18, 0
      %p101 = por %p99, %p100
      %p102 = scmp.ne.s32.totalorder %s94, %s96
      %p103 = scmp.eq.s32.totalorder %s23, 1
      %p104 = por %p102, %p103
      %p105 = scmp.ne.s32.totalorder %s96, %s97
      %p106 = scmp.eq.s32.totalorder %s23, 0
      %p107 = por %p105, %p106
      %p108 = scmp.ne.s32.totalorder %s96, %s97
      %p109 = scmp.eq.s32.totalorder %s24, 1
      %p110 = por %p108, %p109
      %p112 = scmp.ne.s32.totalorder %s97, %s111
      %p113 = scmp.eq.s32.totalorder %s24, 0
      %p114 = por %p112, %p113
      %s116 = sadd.s32 %s115, 1
      %p119 = scmp.eq.s32.totalorder %s18, 1
      %p120 = scmp.ne.s32.totalorder %s115, %s117
      %p121 = scmp.eq.s32.totalorder %s18, 0
      %p122 = por %p120, %p121
      %p123 = scmp.ne.s32.totalorder %s115, %s117
      %p124 = scmp.eq.s32.totalorder %s23, 1
      %p125 = por %p123, %p124
      %p126 = scmp.ne.s32.totalorder %s117, %s118
      %p127 = scmp.eq.s32.totalorder %s23, 0
      %p128 = por %p126, %p127
      %p129 = scmp.ne.s32.totalorder %s117, %s118
      %p130 = scmp.eq.s32.totalorder %s24, 1
      %p131 = por %p129, %p130
      %p133 = scmp.ne.s32.totalorder %s118, %s132
      %p134 = scmp.eq.s32.totalorder %s24, 0
      %p135 = por %p133, %p134
      %s137 = sadd.s32 %s136, 1
      %p140 = scmp.eq.s32.totalorder %s18, 1
      %p141 = scmp.ne.s32.totalorder %s136, %s138
      %p142 = scmp.eq.s32.totalorder %s18, 0
      %p143 = por %p141, %p142
      %p144 = scmp.ne.s32.totalorder %s136, %s138
      %p145 = scmp.eq.s32.totalorder %s23, 1
      %p146 = por %p144, %p145
      %p147 = scmp.ne.s32.totalorder %s138, %s139
      %p148 = scmp.eq.s32.totalorder %s23, 0
      %p149 = por %p147, %p148
      %p150 = scmp.ne.s32.totalorder %s138, %s139
      %p151 = scmp.eq.s32.totalorder %s24, 1
      %p152 = por %p150, %p151
      %p154 = scmp.ne.s32.totalorder %s139, %s153
      %p155 = scmp.eq.s32.totalorder %s24, 0
      %p156 = por %p154, %p155
      %s158 = sadd.s32 %s157, 1
      %p161 = scmp.eq.s32.totalorder %s18, 1
      %p162 = scmp.ne.s32.totalorder %s157, %s159
      %p163 = scmp.eq.s32.totalorder %s18, 0
      %p164 = por %p162, %p163
      %p165 = scmp.ne.s32.totalorder %s157, %s159
      %p166 = scmp.eq.s32.totalorder %s23, 1
      %p167 = por %p165, %p166
      %p168 = scmp.ne.s32.totalorder %s159, %s160
      %p169 = scmp.eq.s32.totalorder %s23, 0
      %p170 = por %p168, %p169
      %p171 = scmp.ne.s32.totalorder %s159, %s160
      %p172 = scmp.eq.s32.totalorder %s24, 1
      %p173 = por %p171, %p172
      %p175 = scmp.ne.s32.totalorder %s160, %s174
      %p176 = scmp.eq.s32.totalorder %s24, 0
      %p177 = por %p175, %p176
      %s178 = ssub.s32 %s18, %s25
      %p179 = scmp.eq.s32.totalorder %s178, 0
      %s181 = sadd.s32 %s180, 1
      %s182 = scalar_select %p179, %s180, %s181
      %p185 = pneg %p179
      %p186 = scmp.eq.s32.totalorder %s18, 1
      %p187 = por %p185, %p186
      %p188 = scmp.ne.s32.totalorder %s180, %s183
      %p189 = scmp.eq.s32.totalorder %s18, 0
      %p190 = por %p188, %p189
      %p191 = scmp.ne.s32.totalorder %s180, %s183
      %p192 = scmp.eq.s32.totalorder %s23, 1
      %p193 = por %p191, %p192
      %p194 = scmp.ne.s32.totalorder %s183, %s184
      %p195 = scmp.eq.s32.totalorder %s23, 0
      %p196 = por %p194, %p195
      %p197 = scmp.ne.s32.totalorder %s183, %s184
      %p198 = scmp.eq.s32.totalorder %s24, 1
      %p199 = por %p197, %p198
      %p201 = scmp.ne.s32.totalorder %s184, %s200
      %p202 = scmp.eq.s32.totalorder %s24, 0
      %p203 = por %p201, %p202
      %p204 = scmp.le.s32.totalorder 1, %s18
      %p205 = scmp.lt.s32.totalorder %s18, 3
      %p206 = pnand %p204, %p205
      %p207 = pneg %p206
      // Predicated region
      $region9: #{tpu_custom_call.1} parent=5 // pred_check
        _
      $region10: #{tpu_custom_call.1} parent=5 // pred_check_branch
        %209 = sbr.rel (%p206) target = $region12
      $region11: #{tpu_custom_call.1} parent=5 // pred_region
        %s210 = ssub.s32 %s18, 1
        // Predicated region
        $region13: #{tpu_custom_call.1} parent=11 // pred_check
          %p211 = pneg %p65
        $region14: #{tpu_custom_call.1} parent=11 // pred_check_branch
          %213 = sbr.rel (%p211) target = $region16
        $region15: #{tpu_custom_call.1} parent=11 // pred_region
          %s215 = ssub.s32 4096, 4096
          %216 = vsyncadd [#allocation5], %s215
          %s217 = sshll.u32 [#allocation4], 4
          %s218 = int_to_ptr.vmem [resolvable:$true] %s217
          %223 = dma.hbm_to_vmem [thread:$0]  %s1, 4096, %s218, [#allocation5], 64, 64, 4
        $region16: #{tpu_custom_call.1} parent=11 // pred_fallthru
          _
        // Predicated region
        $region17: #{tpu_custom_call.1} parent=11 // pred_check
          %p224 = pneg %p86
        $region18: #{tpu_custom_call.1} parent=11 // pred_check_branch
          %226 = sbr.rel (%p224) target = $region20
        $region19: #{tpu_custom_call.1} parent=11 // pred_region
          _
        $region20: #{tpu_custom_call.1} parent=11 // pred_fallthru
          _
        // Predicated region
        $region21: #{tpu_custom_call.1} parent=11 // pred_check
          %p227 = pneg %p107
        $region22: #{tpu_custom_call.1} parent=11 // pred_check_branch
          %229 = sbr.rel (%p227) target = $region24
        $region23: #{tpu_custom_call.1} parent=11 // pred_region
          %s231 = ssub.s32 1024, 1024
          %232 = vsyncadd [#allocation5], %s231
          %s233 = sshll.u32 [#allocation6], 4
          %s234 = int_to_ptr.vmem [resolvable:$true] %s233
          %239 = dma.hbm_to_vmem [thread:$0]  %s3, 1024, %s234, [#allocation5], 64, 64, 4
        $region24: #{tpu_custom_call.1} parent=11 // pred_fallthru
          _
        // Predicated region
        $region25: #{tpu_custom_call.1} parent=11 // pred_check
          %p240 = pneg %p128
        $region26: #{tpu_custom_call.1} parent=11 // pred_check_branch
          %242 = sbr.rel (%p240) target = $region28
        $region27: #{tpu_custom_call.1} parent=11 // pred_region
          _
        $region28: #{tpu_custom_call.1} parent=11 // pred_fallthru
          _
        // Predicated region
        $region29: #{tpu_custom_call.1} parent=11 // pred_check
          %p243 = pneg %p149
        $region30: #{tpu_custom_call.1} parent=11 // pred_check_branch
          %245 = sbr.rel (%p243) target = $region32
        $region31: #{tpu_custom_call.1} parent=11 // pred_region
          %s247 = ssub.s32 1024, 1024
          %248 = vsyncadd [#allocation8], %s247
          %s249 = sshll.u32 [#allocation7], 4
          %s250 = int_to_ptr.vmem [resolvable:$true] %s249
          %255 = dma.hbm_to_vmem [thread:$0]  %s5, 1024, %s250, [#allocation8], 64, 64, 4
        $region32: #{tpu_custom_call.1} parent=11 // pred_fallthru
          _
        // Predicated region
        $region33: #{tpu_custom_call.1} parent=11 // pred_check
          %p256 = pneg %p170
        $region34: #{tpu_custom_call.1} parent=11 // pred_check_branch
          %258 = sbr.rel (%p256) target = $region36
        $region35: #{tpu_custom_call.1} parent=11 // pred_region
          _
        $region36: #{tpu_custom_call.1} parent=11 // pred_fallthru
          _
      $region12: #{tpu_custom_call.1} parent=5 // pred_fallthru
        _
      %p259 = scmp.lt.s32.totalorder %s18, 2
      // Predicated region
      $region37: #{tpu_custom_call.1} parent=5 // pred_check
        %p260 = pneg %p259
      $region38: #{tpu_custom_call.1} parent=5 // pred_check_branch
        %262 = sbr.rel (%p260) target = $region40
      $region39: #{tpu_custom_call.1} parent=5 // pred_region
        // Predicated region
        $region41: #{tpu_custom_call.1} parent=39 // pred_check
          %p263 = pneg %p38
        $region42: #{tpu_custom_call.1} parent=39 // pred_check_branch
          %265 = sbr.rel (%p263) target = $region44
        $region43: #{tpu_custom_call.1} parent=39 // pred_region
          %s266 = sand.u32 %s28, 1
          %s267 = scalar_lea.sflag [#allocation3], %s266
          %s268 = sand.u32 %s28, 1
          %s269 = smul.addr %s268, 32
          %s270 = scalar_lea.vmem [#allocation2], %s269
          %s272 = ssub.s32 512, 512
          %273 = vsyncadd %s267, %s272
          %s274 = smul.addr %s18, 4
          %s275 = smul.addr %s274, 128
          %s276 = scalar_lea.hbm %s0, %s275
          %s278 = sshll.u32 %s270, 4
          %s279 = int_to_ptr.vmem [resolvable:$true] %s278
          %281 = dma.hbm_to_vmem [thread:$0]  %s276, 512, %s279, %s267
        $region44: #{tpu_custom_call.1} parent=39 // pred_fallthru
          _
      $region40: #{tpu_custom_call.1} parent=5 // pred_fallthru
        _
      %p282 = scmp.le.s32.totalorder 1, %s18
      %p283 = scmp.lt.s32.totalorder %s18, 3
      %p284 = pnand %p282, %p283
      %p285 = pneg %p284
      // Predicated region
      $region45: #{tpu_custom_call.1} parent=5 // pred_check
        _
      $region46: #{tpu_custom_call.1} parent=5 // pred_check_branch
        %287 = sbr.rel (%p284) target = $region48
      $region47: #{tpu_custom_call.1} parent=5 // pred_region
        %s288 = ssub.s32 %s18, 1
        %s289 = sand.u32 %s31, 1
        %s290 = scalar_lea.sflag [#allocation3], %s289
        %s291 = sand.u32 %s31, 1
        %s292 = smul.addr %s291, 32
        %s293 = scalar_lea.vmem [#allocation2], %s292
        // Predicated region
        $region49: #{tpu_custom_call.1} parent=47 // pred_check
          %p294 = pneg %p44
        $region50: #{tpu_custom_call.1} parent=47 // pred_check_branch
          %296 = sbr.rel (%p294) target = $region52
        $region51: #{tpu_custom_call.1} parent=47 // pred_region
          %297 = dma.done %s290, 512
        $region52: #{tpu_custom_call.1} parent=47 // pred_fallthru
          _
        // Predicated region
        $region53: #{tpu_custom_call.1} parent=47 // pred_check
          %p298 = pneg %p65
        $region54: #{tpu_custom_call.1} parent=47 // pred_check_branch
          %300 = sbr.rel (%p298) target = $region56
        $region55: #{tpu_custom_call.1} parent=47 // pred_region
          %301 = dma.done [#allocation5], 4096
        $region56: #{tpu_custom_call.1} parent=47 // pred_fallthru
          _
        // Predicated region
        $region57: #{tpu_custom_call.1} parent=47 // pred_check
          %p302 = pneg %p107
        $region58: #{tpu_custom_call.1} parent=47 // pred_check_branch
          %304 = sbr.rel (%p302) target = $region60
        $region59: #{tpu_custom_call.1} parent=47 // pred_region
          %305 = dma.done [#allocation5], 1024
        $region60: #{tpu_custom_call.1} parent=47 // pred_fallthru
          _
        // Predicated region
        $region61: #{tpu_custom_call.1} parent=47 // pred_check
          %p306 = pneg %p149
        $region62: #{tpu_custom_call.1} parent=47 // pred_check_branch
          %308 = sbr.rel (%p306) target = $region64
        $region63: #{tpu_custom_call.1} parent=47 // pred_region
          %309 = dma.done [#allocation8], 1024
        $region64: #{tpu_custom_call.1} parent=47 // pred_fallthru
          _
        %s310 = sand.u32 %s31, 1
        %s311 = scalar_lea.sflag [#allocation3], %s310
        %s312 = sand.u32 %s31, 1
        %s313 = smul.addr %s312, 32
        %s314 = scalar_lea.vmem [#allocation2], %s313
        %p315 = pneg %p44
        %p316 = pneg %p41
        %p317 = pneg %p65
        %p318 = pneg %p62
        %p319 = pneg %p86
        %p320 = pneg %p83
        %p321 = pneg %p107
        %p322 = pneg %p104
        %p323 = pneg %p128
        %p324 = pneg %p125
        %p325 = pneg %p149
        %p326 = pneg %p146
        %p327 = pneg %p170
        %p328 = pneg %p167
        %p329 = pneg %p196
        %p330 = pneg %p193
        %p331 = scmp.lt.s32.totalorder %s23, 1
        %s332 = scalar_select %p331, %s23, 1
        %s333 = smul.addr %s332, 8
        %s334 = scalar_lea.vmem %s7, %s333
        %p335 = scmp.lt.s32.totalorder %s23, 1
        %s336 = scalar_select %p335, %s23, 1
        %s337 = smul.addr %s336, 8
        %s338 = scalar_lea.vmem %s7, %s337
        %v340 = vld [vmem:[%s293] sm:$0xff]
        %v341 = vld [vmem:[%s293 + $0x8] sm:$0xff]
        %v342 = vld [vmem:[%s293 + $0x10] sm:$0xff]
        %v343 = vld [vmem:[%s293 + $0x18] sm:$0xff]
        %v344 = vpack.c.bf16 %v340, %v340
        %v345 = vpack.c.bf16 %v341, %v341
        %v346 = vpack.c.bf16 %v342, %v342
        %v347 = vpack.c.bf16 %v343, %v343
        %v348 = vld [vmem:[#allocation4] sm:$0xf]
        %v349 = vld [vmem:[#allocation4 + $0x4] sm:$0xf]
        %v350 = vld [vmem:[#allocation4 + $0x8] sm:$0xf]
        %v351 = vld [vmem:[#allocation4 + $0xc] sm:$0xf]
        %v352 = vld [vmem:[#allocation4 + $0x10] sm:$0xf]
        %v353 = vld [vmem:[#allocation4 + $0x14] sm:$0xf]
        %v354 = vld [vmem:[#allocation4 + $0x18] sm:$0xf]
        %v355 = vld [vmem:[#allocation4 + $0x1c] sm:$0xf]
        %v356 = vld [vmem:[#allocation4 + $0x20] sm:$0xf]
        %v357 = vld [vmem:[#allocation4 + $0x24] sm:$0xf]
        %v358 = vld [vmem:[#allocation4 + $0x28] sm:$0xf]
        %v359 = vld [vmem:[#allocation4 + $0x2c] sm:$0xf]
        %v360 = vld [vmem:[#allocation4 + $0x30] sm:$0xf]
        %v361 = vld [vmem:[#allocation4 + $0x34] sm:$0xf]
        %v362 = vld [vmem:[#allocation4 + $0x38] sm:$0xf]
        %v363 = vld [vmem:[#allocation4 + $0x3c] sm:$0xf]
        %v364 = vld [vmem:[#allocation4 + $0x40] sm:$0xf]
        %v365 = vld [vmem:[#allocation4 + $0x44] sm:$0xf]
        %v366 = vld [vmem:[#allocation4 + $0x48] sm:$0xf]
        %v367 = vld [vmem:[#allocation4 + $0x4c] sm:$0xf]
        %v368 = vld [vmem:[#allocation4 + $0x50] sm:$0xf]
        %v369 = vld [vmem:[#allocation4 + $0x54] sm:$0xf]
        %v370 = vld [vmem:[#allocation4 + $0x58] sm:$0xf]
        %v371 = vld [vmem:[#allocation4 + $0x5c] sm:$0xf]
        %v372 = vld [vmem:[#allocation4 + $0x60] sm:$0xf]
        %v373 = vld [vmem:[#allocation4 + $0x64] sm:$0xf]
        %v374 = vld [vmem:[#allocation4 + $0x68] sm:$0xf]
        %v375 = vld [vmem:[#allocation4 + $0x6c] sm:$0xf]
        %v376 = vld [vmem:[#allocation4 + $0x70] sm:$0xf]
        %v377 = vld [vmem:[#allocation4 + $0x74] sm:$0xf]
        %v378 = vld [vmem:[#allocation4 + $0x78] sm:$0xf]
        %v379 = vld [vmem:[#allocation4 + $0x7c] sm:$0xf]
        %v380 = vld [vmem:[#allocation4 + $0x80] sm:$0xf]
        %v381 = vld [vmem:[#allocation4 + $0x84] sm:$0xf]
        %v382 = vld [vmem:[#allocation4 + $0x88] sm:$0xf]
        %v383 = vld [vmem:[#allocation4 + $0x8c] sm:$0xf]
        %v384 = vld [vmem:[#allocation4 + $0x90] sm:$0xf]
        %v385 = vld [vmem:[#allocation4 + $0x94] sm:$0xf]
        %v386 = vld [vmem:[#allocation4 + $0x98] sm:$0xf]
        %v387 = vld [vmem:[#allocation4 + $0x9c] sm:$0xf]
        %v388 = vld [vmem:[#allocation4 + $0xa0] sm:$0xf]
        %v389 = vld [vmem:[#allocation4 + $0xa4] sm:$0xf]
        %v390 = vld [vmem:[#allocation4 + $0xa8] sm:$0xf]
        %v391 = vld [vmem:[#allocation4 + $0xac] sm:$0xf]
        %v392 = vld [vmem:[#allocation4 + $0xb0] sm:$0xf]
        %v393 = vld [vmem:[#allocation4 + $0xb4] sm:$0xf]
        %v394 = vld [vmem:[#allocation4 + $0xb8] sm:$0xf]
        %v395 = vld [vmem:[#allocation4 + $0xbc] sm:$0xf]
        %v396 = vld [vmem:[#allocation4 + $0xc0] sm:$0xf]
        %v397 = vld [vmem:[#allocation4 + $0xc4] sm:$0xf]
        %v398 = vld [vmem:[#allocation4 + $0xc8] sm:$0xf]
        %v399 = vld [vmem:[#allocation4 + $0xcc] sm:$0xf]
        %v400 = vld [vmem:[#allocation4 + $0xd0] sm:$0xf]
        %v401 = vld [vmem:[#allocation4 + $0xd4] sm:$0xf]
        %v402 = vld [vmem:[#allocation4 + $0xd8] sm:$0xf]
        %v403 = vld [vmem:[#allocation4 + $0xdc] sm:$0xf]
        %v404 = vld [vmem:[#allocation4 + $0xe0] sm:$0xf]
        %v405 = vld [vmem:[#allocation4 + $0xe4] sm:$0xf]
        %v406 = vld [vmem:[#allocation4 + $0xe8] sm:$0xf]
        %v407 = vld [vmem:[#allocation4 + $0xec] sm:$0xf]
        %v408 = vld [vmem:[#allocation4 + $0xf0] sm:$0xf]
        %v409 = vld [vmem:[#allocation4 + $0xf4] sm:$0xf]
        %v410 = vld [vmem:[#allocation4 + $0xf8] sm:$0xf]
        %v411 = vld [vmem:[#allocation4 + $0xfc] sm:$0xf]
        %v412 = vld [vmem:[%s2] sm:$0x1]
        %v414 = vlaneseq
        %v415 = vshrl.u32 %v414, 7
        %v416 = vsub.s32 0, %v415
        %v417 = vrot.slane %v412, %v416
        %v483 = vunpack.c.l.b16 %v348
        %v484 = vunpack.c.l.b16 %v349
        %v485 = vunpack.c.l.b16 %v350
        %v486 = vunpack.c.l.b16 %v351
        %v487 = vunpack.c.l.b16 %v352
        %v488 = vunpack.c.l.b16 %v353
        %v489 = vunpack.c.l.b16 %v354
        %v490 = vunpack.c.l.b16 %v355
        %v491 = vunpack.c.l.b16 %v356
        %v492 = vunpack.c.l.b16 %v357
        %v493 = vunpack.c.l.b16 %v358
        %v494 = vunpack.c.l.b16 %v359
        %v495 = vunpack.c.l.b16 %v360
        %v496 = vunpack.c.l.b16 %v361
        %v497 = vunpack.c.l.b16 %v362
        %v498 = vunpack.c.l.b16 %v363
        %v499 = vunpack.c.l.b16 %v364
        %v500 = vunpack.c.l.b16 %v365
        %v501 = vunpack.c.l.b16 %v366
        %v502 = vunpack.c.l.b16 %v367
        %v503 = vunpack.c.l.b16 %v368
        %v504 = vunpack.c.l.b16 %v369
        %v505 = vunpack.c.l.b16 %v370
        %v506 = vunpack.c.l.b16 %v371
        %v507 = vunpack.c.l.b16 %v372
        %v508 = vunpack.c.l.b16 %v373
        %v509 = vunpack.c.l.b16 %v374
        %v510 = vunpack.c.l.b16 %v375
        %v511 = vunpack.c.l.b16 %v376
        %v512 = vunpack.c.l.b16 %v377
        %v513 = vunpack.c.l.b16 %v378
        %v514 = vunpack.c.l.b16 %v379
        %v515 = vunpack.c.l.b16 %v380
        %v516 = vunpack.c.l.b16 %v381
        %v517 = vunpack.c.l.b16 %v382
        %v518 = vunpack.c.l.b16 %v383
        %v519 = vunpack.c.l.b16 %v384
        %v520 = vunpack.c.l.b16 %v385
        %v521 = vunpack.c.l.b16 %v386
        %v522 = vunpack.c.l.b16 %v387
        %v523 = vunpack.c.l.b16 %v388
        %v524 = vunpack.c.l.b16 %v389
        %v525 = vunpack.c.l.b16 %v390
        %v526 = vunpack.c.l.b16 %v391
        %v527 = vunpack.c.l.b16 %v392
        %v528 = vunpack.c.l.b16 %v393
        %v529 = vunpack.c.l.b16 %v394
        %v530 = vunpack.c.l.b16 %v395
        %v531 = vunpack.c.l.b16 %v396
        %v532 = vunpack.c.l.b16 %v397
        %v533 = vunpack.c.l.b16 %v398
        %v534 = vunpack.c.l.b16 %v399
        %v535 = vunpack.c.l.b16 %v400
        %v536 = vunpack.c.l.b16 %v401
        %v537 = vunpack.c.l.b16 %v402
        %v538 = vunpack.c.l.b16 %v403
        %v539 = vunpack.c.l.b16 %v404
        %v540 = vunpack.c.l.b16 %v405
        %v541 = vunpack.c.l.b16 %v406
        %v542 = vunpack.c.l.b16 %v407
        %v543 = vunpack.c.l.b16 %v408
        %v544 = vunpack.c.l.b16 %v409
        %v545 = vunpack.c.l.b16 %v410
        %v546 = vunpack.c.l.b16 %v411
        %v547 = vpack.c.b16 %v484, %v483
        %v548 = vpack.c.b16 %v486, %v485
        %v549 = vpack.c.b16 %v488, %v487
        %v550 = vpack.c.b16 %v490, %v489
        %v551 = vpack.c.b16 %v492, %v491
        %v552 = vpack.c.b16 %v494, %v493
        %v553 = vpack.c.b16 %v496, %v495
        %v554 = vpack.c.b16 %v498, %v497
        %v555 = vpack.c.b16 %v500, %v499
        %v556 = vpack.c.b16 %v502, %v501
        %v557 = vpack.c.b16 %v504, %v503
        %v558 = vpack.c.b16 %v506, %v505
        %v559 = vpack.c.b16 %v508, %v507
        %v560 = vpack.c.b16 %v510, %v509
        %v561 = vpack.c.b16 %v512, %v511
        %v562 = vpack.c.b16 %v514, %v513
        %v563 = vpack.c.b16 %v516, %v515
        %v564 = vpack.c.b16 %v518, %v517
        %v565 = vpack.c.b16 %v520, %v519
        %v566 = vpack.c.b16 %v522, %v521
        %v567 = vpack.c.b16 %v524, %v523
        %v568 = vpack.c.b16 %v526, %v525
        %v569 = vpack.c.b16 %v528, %v527
        %v570 = vpack.c.b16 %v530, %v529
        %v571 = vpack.c.b16 %v532, %v531
        %v572 = vpack.c.b16 %v534, %v533
        %v573 = vpack.c.b16 %v536, %v535
        %v574 = vpack.c.b16 %v538, %v537
        %v575 = vpack.c.b16 %v540, %v539
        %v576 = vpack.c.b16 %v542, %v541
        %v577 = vpack.c.b16 %v544, %v543
        %v578 = vpack.c.b16 %v546, %v545
        %611 = vmatprep.subr.bf16.mxu0 0
        %612 = vmatpush1.bf16.msra.mxu0 %v547
        %613 = vmatprep.subr.bf16.mxu0 0
        %614 = vmatpush1.bf16.msra.mxu0 %v548
        %615 = vmatprep.subr.bf16.mxu0 0
        %616 = vmatpush1.bf16.msra.mxu0 %v549
        %617 = vmatprep.subr.bf16.mxu0 0
        %618 = vmatpush1.bf16.msra.mxu0 %v550
        %619 = vmatprep.subr.bf16.mxu0 0
        %620 = vmatpush1.bf16.msra.mxu0 %v551
        %621 = vmatprep.subr.bf16.mxu0 0
        %622 = vmatpush1.bf16.msra.mxu0 %v552
        %623 = vmatprep.subr.bf16.mxu0 0
        %624 = vmatpush1.bf16.msra.mxu0 %v553
        %625 = vmatprep.subr.bf16.mxu0 0
        %626 = vmatpush1.bf16.msra.mxu0 %v554
        %627 = vmatprep.subr.bf16.mxu0 0
        %628 = vmatpush1.bf16.msra.mxu0 %v555
        %629 = vmatprep.subr.bf16.mxu0 0
        %630 = vmatpush1.bf16.msra.mxu0 %v556
        %631 = vmatprep.subr.bf16.mxu0 0
        %632 = vmatpush1.bf16.msra.mxu0 %v557
        %633 = vmatprep.subr.bf16.mxu0 0
        %634 = vmatpush1.bf16.msra.mxu0 %v558
        %635 = vmatprep.subr.bf16.mxu0 0
        %636 = vmatpush1.bf16.msra.mxu0 %v559
        %637 = vmatprep.subr.bf16.mxu0 0
        %638 = vmatpush1.bf16.msra.mxu0 %v560
        %639 = vmatprep.subr.bf16.mxu0 0
        %640 = vmatpush1.bf16.msra.mxu0 %v561
        %641 = vmatprep.subr.bf16.mxu0 0
        %642 = vmatpush1.bf16.msra.mxu0 %v562
        %643 = vmatprep.mubr.bf16.mxu0 %v345
        %644 = vmatmul.mubr.bf16.gmra.mrb[0].mxu0 %v344
        %v645 = vpop.f32.mrb[0].mxu0
        %v646 = vadd.f32 %v417, %v645
        %v647 = vpop.f32.mrb[0].mxu0
        %v648 = vpop.f32.mrb[0].mxu0
        %v649 = vpop.f32.mrb[0].mxu0
        %650 = vdwg.mxu0
        %651 = vmatprep.subr.bf16.mxu0 0
        %652 = vmatpush1.bf16.msra.mxu0 %v563
        %653 = vmatprep.subr.bf16.mxu0 0
        %654 = vmatpush1.bf16.msra.mxu0 %v564
        %655 = vmatprep.subr.bf16.mxu0 0
        %656 = vmatpush1.bf16.msra.mxu0 %v565
        %657 = vmatprep.subr.bf16.mxu0 0
        %658 = vmatpush1.bf16.msra.mxu0 %v566
        %659 = vmatprep.subr.bf16.mxu0 0
        %660 = vmatpush1.bf16.msra.mxu0 %v567
        %661 = vmatprep.subr.bf16.mxu0 0
        %662 = vmatpush1.bf16.msra.mxu0 %v568
        %663 = vmatprep.subr.bf16.mxu0 0
        %664 = vmatpush1.bf16.msra.mxu0 %v569
        %665 = vmatprep.subr.bf16.mxu0 0
        %666 = vmatpush1.bf16.msra.mxu0 %v570
        %667 = vmatprep.subr.bf16.mxu0 0
        %668 = vmatpush1.bf16.msra.mxu0 %v571
        %669 = vmatprep.subr.bf16.mxu0 0
        %670 = vmatpush1.bf16.msra.mxu0 %v572
        %671 = vmatprep.subr.bf16.mxu0 0
        %672 = vmatpush1.bf16.msra.mxu0 %v573
        %673 = vmatprep.subr.bf16.mxu0 0
        %674 = vmatpush1.bf16.msra.mxu0 %v574
        %675 = vmatprep.subr.bf16.mxu0 0
        %676 = vmatpush1.bf16.msra.mxu0 %v575
        %677 = vmatprep.subr.bf16.mxu0 0
        %678 = vmatpush1.bf16.msra.mxu0 %v576
        %679 = vmatprep.subr.bf16.mxu0 0
        %680 = vmatpush1.bf16.msra.mxu0 %v577
        %681 = vmatprep.subr.bf16.mxu0 0
        %682 = vmatpush1.bf16.msra.mxu0 %v578
        %683 = vmatprep.mubr.bf16.mxu0 %v347
        %684 = vmatmul.mubr.bf16.gmra.mrb[0].mxu0 %v346
        %v685 = vpop.f32.mrb[0].mxu0
        %v686 = vadd.f32 %v646, %v685
        %v687 = vpop.f32.mrb[0].mxu0
        %v688 = vpop.f32.mrb[0].mxu0
        %v689 = vpop.f32.mrb[0].mxu0
        %690 = vdwg.mxu0
        %v691 = vmax.f32 %v686, 0.0
        %v692 = vpack.c.bf16 %v691, %v691
        %v693 = vld [vmem:[#allocation6] sm:$0xf]
        %v694 = vld [vmem:[#allocation6 + $0x4] sm:$0xf]
        %v695 = vld [vmem:[#allocation6 + $0x8] sm:$0xf]
        %v696 = vld [vmem:[#allocation6 + $0xc] sm:$0xf]
        %v697 = vld [vmem:[#allocation6 + $0x10] sm:$0xf]
        %v698 = vld [vmem:[#allocation6 + $0x14] sm:$0xf]
        %v699 = vld [vmem:[#allocation6 + $0x18] sm:$0xf]
        %v700 = vld [vmem:[#allocation6 + $0x1c] sm:$0xf]
        %v701 = vld [vmem:[#allocation6 + $0x20] sm:$0xf]
        %v702 = vld [vmem:[#allocation6 + $0x24] sm:$0xf]
        %v703 = vld [vmem:[#allocation6 + $0x28] sm:$0xf]
        %v704 = vld [vmem:[#allocation6 + $0x2c] sm:$0xf]
        %v705 = vld [vmem:[#allocation6 + $0x30] sm:$0xf]
        %v706 = vld [vmem:[#allocation6 + $0x34] sm:$0xf]
        %v707 = vld [vmem:[#allocation6 + $0x38] sm:$0xf]
        %v708 = vld [vmem:[#allocation6 + $0x3c] sm:$0xf]
        %v709 = vld [vmem:[%s4] sm:$0x1]
        %v711 = vlaneseq
        %v712 = vshrl.u32 %v711, 7
        %v713 = vsub.s32 0, %v712
        %v714 = vrot.slane %v709, %v713
        %v732 = vunpack.c.l.b16 %v693
        %v733 = vunpack.c.l.b16 %v694
        %v734 = vunpack.c.l.b16 %v695
        %v735 = vunpack.c.l.b16 %v696
        %v736 = vunpack.c.l.b16 %v697
        %v737 = vunpack.c.l.b16 %v698
        %v738 = vunpack.c.l.b16 %v699
        %v739 = vunpack.c.l.b16 %v700
        %v740 = vunpack.c.l.b16 %v701
        %v741 = vunpack.c.l.b16 %v702
        %v742 = vunpack.c.l.b16 %v703
        %v743 = vunpack.c.l.b16 %v704
        %v744 = vunpack.c.l.b16 %v705
        %v745 = vunpack.c.l.b16 %v706
        %v746 = vunpack.c.l.b16 %v707
        %v747 = vunpack.c.l.b16 %v708
        %v748 = vpack.c.b16 %v733, %v732
        %v749 = vpack.c.b16 %v735, %v734
        %v750 = vpack.c.b16 %v737, %v736
        %v751 = vpack.c.b16 %v739, %v738
        %v752 = vpack.c.b16 %v741, %v740
        %v753 = vpack.c.b16 %v743, %v742
        %v754 = vpack.c.b16 %v745, %v744
        %v755 = vpack.c.b16 %v747, %v746
        %764 = vmatprep.subr.bf16.mxu0 0
        %765 = vmatpush1.bf16.msra.mxu0 %v748
        %766 = vmatprep.subr.bf16.mxu0 0
        %767 = vmatpush1.bf16.msra.mxu0 %v749
        %768 = vmatprep.subr.bf16.mxu0 0
        %769 = vmatpush1.bf16.msra.mxu0 %v750
        %770 = vmatprep.subr.bf16.mxu0 0
        %771 = vmatpush1.bf16.msra.mxu0 %v751
        %772 = vmatprep.subr.bf16.mxu0 0
        %773 = vmatpush1.bf16.msra.mxu0 %v752
        %774 = vmatprep.subr.bf16.mxu0 0
        %775 = vmatpush1.bf16.msra.mxu0 %v753
        %776 = vmatprep.subr.bf16.mxu0 0
        %777 = vmatpush1.bf16.msra.mxu0 %v754
        %778 = vmatprep.subr.bf16.mxu0 0
        %779 = vmatpush1.bf16.msra.mxu0 %v755
        %780 = vmatprep.subr.bf16.mxu0 0
        %781 = vmatpush1.bf16.msra.mxu0 0
        %782 = vmatprep.subr.bf16.mxu0 0
        %783 = vmatpush1.bf16.msra.mxu0 0
        %784 = vmatprep.subr.bf16.mxu0 0
        %785 = vmatpush1.bf16.msra.mxu0 0
        %786 = vmatprep.subr.bf16.mxu0 0
        %787 = vmatpush1.bf16.msra.mxu0 0
        %788 = vmatprep.subr.bf16.mxu0 0
        %789 = vmatpush1.bf16.msra.mxu0 0
        %790 = vmatprep.subr.bf16.mxu0 0
        %791 = vmatpush1.bf16.msra.mxu0 0
        %792 = vmatprep.subr.bf16.mxu0 0
        %793 = vmatpush1.bf16.msra.mxu0 0
        %794 = vmatprep.subr.bf16.mxu0 0
        %795 = vmatpush1.bf16.msra.mxu0 0
        %796 = vmatprep.mubr.bf16.mxu0 0
        %797 = vmatmul.mubr.bf16.gmra.mrb[0].mxu0 %v692
        %v798 = vpop.f32.mrb[0].mxu0
        %v799 = vadd.f32 %v714, %v798
        %v800 = vpop.f32.mrb[0].mxu0
        %v801 = vpop.f32.mrb[0].mxu0
        %v802 = vpop.f32.mrb[0].mxu0
        %803 = vdwg.mxu0
        %v804 = vmax.f32 %v799, 0.0
        %v805 = vpack.c.bf16 %v804, %v804
        %v806 = vld [vmem:[#allocation7] sm:$0xf]
        %v807 = vld [vmem:[#allocation7 + $0x4] sm:$0xf]
        %v808 = vld [vmem:[#allocation7 + $0x8] sm:$0xf]
        %v809 = vld [vmem:[#allocation7 + $0xc] sm:$0xf]
        %v810 = vld [vmem:[#allocation7 + $0x10] sm:$0xf]
        %v811 = vld [vmem:[#allocation7 + $0x14] sm:$0xf]
        %v812 = vld [vmem:[#allocation7 + $0x18] sm:$0xf]
        %v813 = vld [vmem:[#allocation7 + $0x1c] sm:$0xf]
        %v814 = vld [vmem:[#allocation7 + $0x20] sm:$0xf]
        %v815 = vld [vmem:[#allocation7 + $0x24] sm:$0xf]
        %v816 = vld [vmem:[#allocation7 + $0x28] sm:$0xf]
        %v817 = vld [vmem:[#allocation7 + $0x2c] sm:$0xf]
        %v818 = vld [vmem:[#allocation7 + $0x30] sm:$0xf]
        %v819 = vld [vmem:[#allocation7 + $0x34] sm:$0xf]
        %v820 = vld [vmem:[#allocation7 + $0x38] sm:$0xf]
        %v821 = vld [vmem:[#allocation7 + $0x3c] sm:$0xf]
        %v822 = vld [vmem:[%s6] sm:$0x1]
        %v824 = vlaneseq
        %v825 = vshrl.u32 %v824, 7
        %v826 = vsub.s32 0, %v825
        %v827 = vrot.slane %v822, %v826
        %v845 = vunpack.c.l.b16 %v806
        %v846 = vunpack.c.l.b16 %v807
        %v847 = vunpack.c.l.b16 %v808
        %v848 = vunpack.c.l.b16 %v809
        %v849 = vunpack.c.l.b16 %v810
        %v850 = vunpack.c.l.b16 %v811
        %v851 = vunpack.c.l.b16 %v812
        %v852 = vunpack.c.l.b16 %v813
        %v853 = vunpack.c.l.b16 %v814
        %v854 = vunpack.c.l.b16 %v815
        %v855 = vunpack.c.l.b16 %v816
        %v856 = vunpack.c.l.b16 %v817
        %v857 = vunpack.c.l.b16 %v818
        %v858 = vunpack.c.l.b16 %v819
        %v859 = vunpack.c.l.b16 %v820
        %v860 = vunpack.c.l.b16 %v821
        %v861 = vpack.c.b16 %v846, %v845
        %v862 = vpack.c.b16 %v848, %v847
        %v863 = vpack.c.b16 %v850, %v849
        %v864 = vpack.c.b16 %v852, %v851
        %v865 = vpack.c.b16 %v854, %v853
        %v866 = vpack.c.b16 %v856, %v855
        %v867 = vpack.c.b16 %v858, %v857
        %v868 = vpack.c.b16 %v860, %v859
        %877 = vmatprep.subr.bf16.mxu0 0
        %878 = vmatpush1.bf16.msra.mxu0 %v861
        %879 = vmatprep.subr.bf16.mxu0 0
        %880 = vmatpush1.bf16.msra.mxu0 %v862
        %881 = vmatprep.subr.bf16.mxu0 0
        %882 = vmatpush1.bf16.msra.mxu0 %v863
        %883 = vmatprep.subr.bf16.mxu0 0
        %884 = vmatpush1.bf16.msra.mxu0 %v864
        %885 = vmatprep.subr.bf16.mxu0 0
        %886 = vmatpush1.bf16.msra.mxu0 %v865
        %887 = vmatprep.subr.bf16.mxu0 0
        %888 = vmatpush1.bf16.msra.mxu0 %v866
        %889 = vmatprep.subr.bf16.mxu0 0
        %890 = vmatpush1.bf16.msra.mxu0 %v867
        %891 = vmatprep.subr.bf16.mxu0 0
        %892 = vmatpush1.bf16.msra.mxu0 %v868
        %893 = vmatprep.subr.bf16.mxu0 0
        %894 = vmatpush1.bf16.msra.mxu0 0
        %895 = vmatprep.subr.bf16.mxu0 0
        %896 = vmatpush1.bf16.msra.mxu0 0
        %897 = vmatprep.subr.bf16.mxu0 0
        %898 = vmatpush1.bf16.msra.mxu0 0
        %899 = vmatprep.subr.bf16.mxu0 0
        %900 = vmatpush1.bf16.msra.mxu0 0
        %901 = vmatprep.subr.bf16.mxu0 0
        %902 = vmatpush1.bf16.msra.mxu0 0
        %903 = vmatprep.subr.bf16.mxu0 0
        %904 = vmatpush1.bf16.msra.mxu0 0
        %905 = vmatprep.subr.bf16.mxu0 0
        %906 = vmatpush1.bf16.msra.mxu0 0
        %907 = vmatprep.subr.bf16.mxu0 0
        %908 = vmatpush1.bf16.msra.mxu0 0
        %909 = vmatprep.mubr.bf16.mxu0 0
        %910 = vmatmul.mubr.bf16.gmra.mrb[0].mxu0 %v805
        %v911 = vpop.f32.mrb[0].mxu0
        %v912 = vadd.f32 %v827, %v911
        %v913 = vpop.f32.mrb[0].mxu0
        %v914 = vpop.f32.mrb[0].mxu0
        %v915 = vpop.f32.mrb[0].mxu0
        %916 = vdwg.mxu0
        %vm917 = vcmask 64512
        %918 = vst.msk [vmem:[%s338] sm:$0xff] %vm917, %v912
        %p919 = scmp.lt.s32.totalorder %s23, 1
        %s920 = scalar_select %p919, %s23, 1
        %s921 = smul.addr %s920, 8
        %s922 = scalar_lea.vmem %s7, %s921
        // Predicated region
        $region65: #{tpu_custom_call.1} parent=47 // pred_check
          %p923 = pneg %p193
        $region66: #{tpu_custom_call.1} parent=47 // pred_check_branch
          %925 = sbr.rel (%p923) target = $region68
        $region67: #{tpu_custom_call.1} parent=47 // pred_region
          _
        $region68: #{tpu_custom_call.1} parent=47 // pred_fallthru
          _
      $region48: #{tpu_custom_call.1} parent=5 // pred_fallthru
        _
      %p926 = scmp.le.s32.totalorder 2, %s18
      // Predicated region
      $region69: #{tpu_custom_call.1} parent=5 // pred_check
        %p927 = pneg %p926
      $region70: #{tpu_custom_call.1} parent=5 // pred_check_branch
        %929 = sbr.rel (%p927) target = $region72
      $region71: #{tpu_custom_call.1} parent=5 // pred_region
        %s930 = ssub.s32 %s18, 2
        // Predicated region
        $region73: #{tpu_custom_call.1} parent=71 // pred_check
          %p931 = pneg %p199
        $region74: #{tpu_custom_call.1} parent=71 // pred_check_branch
          %933 = sbr.rel (%p931) target = $region76
        $region75: #{tpu_custom_call.1} parent=71 // pred_region
          %p934 = scmp.lt.s32.totalorder %s24, 1
          %s935 = scalar_select %p934, %s24, 1
          %s936 = smul.addr %s935, 8
          %s937 = scalar_lea.vmem %s7, %s936
        $region76: #{tpu_custom_call.1} parent=71 // pred_fallthru
          _
      $region72: #{tpu_custom_call.1} parent=5 // pred_fallthru
        _
    $region6: #{tpu_custom_call.1} parent=1 // loop_footer
      %s22 = sadd.s32 1, %s18
    $region7: #{tpu_custom_call.1} parent=1 // loop_footer_branch
      %17 = sbr.rel target = $region3
    $region8: #{tpu_custom_call.1} parent=1 // loop_exit
      _
    %938 = vsyncpa [#allocation3], 1
    %s939 = scalar_lea.sflag [#allocation3], 1
    %940 = vsyncpa %s939, 1
    %941 = vsyncpa [#allocation5], 1
    %942 = vsyncpa [#allocation8], 1

</llo_original>
